<compile_context>
chip_gen: v7x
topology: tpu7x:2x2x1
jax: 0.10.0
libtpu: 0.0.40
codegen_flags: <defaults>
</compile_context>

<pallas_src>
import functools

import jax
import jax.numpy as jnp
from jax import lax
from jax.experimental import pallas as pl
from jax.experimental.pallas import tpu as pltpu


def _round_up(v, m):
    return ((v + m - 1) // m) * m


def _device_kind():
    try:
        return jax.devices()[0].device_kind.lower()
    except Exception:
        return ""


def _vmem_capacity_bytes():
    """Per-core VMEM capacity; conservative 64 MiB fallback (v7x per-TC physical)."""
    try:
        cap = int(getattr(pltpu.get_tpu_info(), "vmem_capacity_bytes", 0))
        if cap > 0:
            return cap
    except Exception:
        pass
    return 64 * 1024 * 1024


def _default_num_splits():
    """2-way parallel row split only where there are 2 TensorCores per chip (v7x)."""
    kind = _device_kind()
    return 2 if ("v7" in kind or "7x" in kind) else 1


def _bf16_wide_ok():
    """bf16 VPU/EUP exists on v6e/v7x; v5e and older must compute the wide path in f32."""
    kind = _device_kind()
    return any(tag in kind for tag in ("v6", "v7", "7x", "trillium"))


def _focal_loss_kernel(x_ref, t_ref, alpha_ref, o_ref, acc_ref, *,
                       gamma, n_rows, tile_n, steps_per_split, wide_dtype):
    s = pl.program_id(0)          # row split (parallel; feeds both TCs on v7x)
    i = pl.program_id(1)          # row-tile step within the split (reduction, arbitrary)

    @pl.when(i == 0)
    def _init():
        acc_ref[...] = jnp.zeros_like(acc_ref)

    x = x_ref[...]
    if x.dtype != wide_dtype:
        x = x.astype(wide_dtype)                    # (T, C) wide path
    t = t_ref[...]                                  # (T, 1) int32 targets
    alpha = alpha_ref[...].astype(jnp.float32)      # (1, C) per-class alpha
    tn, c = x.shape

    # --- log-sum-exp denominator (wide path on VPU/EUP; f32 accumulation) ---
    m = jnp.max(x, axis=1, keepdims=True)                              # (T, 1)
    e = jnp.exp(x - m)                                                 # (T, C)
    denom = jnp.sum(e.astype(jnp.float32), axis=1, keepdims=True)      # (T, 1) f32

    # --- one-hot gathers of target logit and alpha (the module's scatter_) ---
    col = lax.broadcasted_iota(jnp.int32, (tn, c), 1)
    onehot = col == t                                                  # (T, C) bool
    x_t = jnp.sum(jnp.where(onehot, x, jnp.zeros_like(x)).astype(jnp.float32),
                  axis=1, keepdims=True)                               # (T, 1) f32
    alpha_t = jnp.sum(jnp.where(onehot, alpha, 0.0),
                      axis=1, keepdims=True)                           # (T, 1) f32

    # --- per-row focal loss (narrow (T, 1) f32 tail) ---
    log_p = (x_t - m.astype(jnp.float32)) - jnp.log(denom)
    probs = jnp.exp(log_p)
    pt = 1.0 - probs
    if gamma == 2.0:
        focal = pt * pt               # VPU multiplies instead of exp(g*log(pt))
    elif gamma == 1.0:
        focal = pt
    elif gamma == 0.0:
        focal = jnp.ones_like(pt)
    else:
        focal = jnp.power(pt, jnp.float32(gamma))
    loss_rows = -alpha_t * focal * log_p                               # (T, 1)

    # Mask rows past the true batch (tail tile and clamped ragged-split overflow tiles).
    row0 = (s * steps_per_split + i) * tile_n      # UNclamped logical row offset
    row = row0 + lax.broadcasted_iota(jnp.int32, (tn, 1), 0)
    loss_rows = jnp.where(row < n_rows, loss_rows, 0.0)

    acc_ref[...] = acc_ref[...] + jnp.sum(loss_rows, axis=0, keepdims=True)

    @pl.when(i == steps_per_split - 1)
    def _flush():
        o_ref[...] = acc_ref[...][None]            # (1, 1, 1) written once per split


def focal_loss(inputs, targets, alpha, *, gamma=2.0, size_average=True,
               num_splits=None, max_tile_rows=None):
    """inputs: (N, C) float32/bfloat16; targets: (N,) int; alpha: (C,) or (C, 1)."""
    n, c = inputs.shape
    t2d = targets.reshape(n, 1).astype(jnp.int32)
    alpha_row = jnp.asarray(alpha, jnp.float32).reshape(1, c)

    in_itemsize = jnp.dtype(inputs.dtype).itemsize
    wide_dtype = (jnp.bfloat16
                  if (inputs.dtype == jnp.bfloat16 and _bf16_wide_ok())
                  else jnp.float32)

    # ---- generation-aware, lane-padded VMEM budget -> row tile size ----
    # TODO(synk): for C << 128, row-pack (N, C) -> (N/r, r*C) in the wrapper with
    # segmented lane reductions in-kernel to recover 128/C lane efficiency on the
    # wide exp path; not implemented here (tile sizing below is the dominant fix).
    c_pad = _round_up(c, 128)                       # lane-padded logits width in VMEM
    per_row_bytes = (2 * c_pad * in_itemsize        # double-buffered logits tile
                     + 2 * 128 * 4                  # double-buffered int32 targets (pads to 128 lanes)
                     + 4 * c_pad * 4)               # estimated in-kernel f32 working set
    vmem_cap = _vmem_capacity_bytes()               # 64 MiB/TC on v7x, 128 MiB on v5e/v6e
    # Tile against ~40% of capacity; hand Mosaic ~75% as the scoped limit so the gap
    # absorbs any underestimate of the compute working set / compiler-internal scratch.
    tile_budget = (vmem_cap * 2) // 5
    vmem_limit = int(min((vmem_cap * 3) // 4, 100 * 1024 * 1024))

    tile_n = max(8, (tile_budget // per_row_bytes) // 8 * 8)
    if max_tile_rows is not None:
        tile_n = min(tile_n, _round_up(max(8, int(max_tile_rows)), 8))
    tile_n = min(tile_n, _round_up(n, 8))

    total_tiles = pl.cdiv(n, tile_n)
    if num_splits is None:
        num_splits = _default_num_splits()
    num_splits = max(1, min(int(num_splits), total_tiles))
    steps_per_split = pl.cdiv(total_tiles, num_splits)

    def in_map(s, i, _tiles=total_tiles, _steps=steps_per_split):
        # Clamp ragged-split overflow steps onto the last real tile; the kernel's
        # row mask zeroes their contribution so nothing is double counted.
        return (jnp.minimum(s * _steps + i, _tiles - 1), 0)

    kernel = functools.partial(
        _focal_loss_kernel,
        gamma=float(gamma), n_rows=n, tile_n=tile_n,
        steps_per_split=steps_per_split, wide_dtype=wide_dtype)

    cost = pl.CostEstimate(
        flops=10 * n * c,
        transcendentals=n * c + 3 * n,
        bytes_accessed=n * c * in_itemsize + n * 4 + c * 4 + num_splits * 4)

    partials = pl.pallas_call(
        kernel,
        out_shape=jax.ShapeDtypeStruct((num_splits, 1, 1), jnp.float32),
        grid=(num_splits, steps_per_split),
        in_specs=[
            pl.BlockSpec((tile_n, c), in_map),
            pl.BlockSpec((tile_n, 1), in_map),
            pl.BlockSpec((1, c), lambda s, i: (0, 0)),
        ],
        out_specs=pl.BlockSpec((1, 1, 1), lambda s, i: (s, 0, 0)),
        scratch_shapes=[pltpu.VMEM((1, 1), jnp.float32)],
        compiler_params=pltpu.CompilerParams(
            dimension_semantics=("parallel", "arbitrary"),
            vmem_limit_bytes=vmem_limit),
        cost_estimate=cost,
    )(inputs, t2d, alpha_row)

    total = jnp.sum(partials[:, 0, 0])
    if size_average:
        total = total / jnp.float32(n)
    return total


def focal_loss_ref(inputs, targets, alpha, *, gamma=2.0, size_average=True):
    """Pure-JAX reference mirroring the PyTorch forward."""
    p = jax.nn.softmax(inputs.astype(jnp.float32), axis=1)
    probs = jnp.take_along_axis(p, targets.reshape(-1, 1), axis=1)
    alpha_t = jnp.asarray(alpha, jnp.float32).reshape(-1)[targets].reshape(-1, 1)
    batch_loss = -alpha_t * (1.0 - probs) ** gamma * jnp.log(probs)
    return batch_loss.mean() if size_average else batch_loss.sum()


if __name__ == "__main__":
    key = jax.random.PRNGKey(0)
    k_x, k_t, k_a = jax.random.split(key, 3)

    # Small shapes consistent with FocalLoss(class_num=C).
    N, C = 8, 16
    inputs = jax.random.normal(k_x, (N, C), dtype=jnp.float32)
    targets = jax.random.randint(k_t, (N,), 0, C, dtype=jnp.int32)
    alpha = jnp.ones((C, 1), dtype=jnp.float32)   # FocalLoss(alpha=None) -> ones(C, 1)

    loss = jax.block_until_ready(focal_loss(inputs, targets, alpha, gamma=2.0))
    ref = focal_loss_ref(inputs, targets, alpha, gamma=2.0)
    assert jnp.allclose(loss, ref, rtol=1e-5, atol=1e-6), (loss, ref)

    loss_sum = jax.block_until_ready(
        focal_loss(inputs, targets, alpha, gamma=2.0, size_average=False))
    ref_sum = focal_loss_ref(inputs, targets, alpha, gamma=2.0, size_average=False)
    assert jnp.allclose(loss_sum, ref_sum, rtol=1e-5, atol=1e-6), (loss_sum, ref_sum)

    # Multi-tile path with a ragged 2-way split (exercises the clamped index_map,
    # the tail-row mask and the per-split scratch accumulator).
    N2, C2 = 300, 16
    x2 = jax.random.normal(k_a, (N2, C2), dtype=jnp.float32)
    t2 = jax.random.randint(k_t, (N2,), 0, C2, dtype=jnp.int32)
    a2 = 0.25 + 0.75 * jax.random.uniform(k_x, (C2, 1), dtype=jnp.float32)
    got2 = jax.block_until_ready(
        focal_loss(x2, t2, a2, gamma=2.0, num_splits=2, max_tile_rows=128))
    ref2 = focal_loss_ref(x2, t2, a2, gamma=2.0)
    assert jnp.allclose(got2, ref2, rtol=1e-5, atol=1e-6), (got2, ref2)

    # bf16 inputs (wide path stays bf16 on v6e/v7x, f32 elsewhere) — loose tolerance.
    xb = x2.astype(jnp.bfloat16)
    got_b = jax.block_until_ready(
        focal_loss(xb, t2, a2, gamma=2.0, num_splits=1, max_tile_rows=128))
    ref_b = focal_loss_ref(xb, t2, a2, gamma=2.0)
    assert jnp.allclose(got_b, ref_b, rtol=5e-2, atol=5e-2), (got_b, ref_b)

    print("KERNEL_OK")
</pallas_src>

<mosaic_0001>
module attributes {stable_mosaic.version = 11 : i64} {
  func.func @_focal_loss_kernel(%arg0: i32, %arg1: i32, %arg2: memref<8x16xf32, #tpu.memory_space<vmem>>, %arg3: memref<8x1xi32, #tpu.memory_space<vmem>>, %arg4: memref<1x16xf32, #tpu.memory_space<vmem>>, %arg5: memref<1x1x1xf32, #tpu.memory_space<vmem>>, %arg6: memref<1x1xf32, #tpu.memory_space<vmem>>) attributes {dimension_semantics = [#tpu.dimension_semantics<parallel>, #tpu.dimension_semantics<arbitrary>], iteration_bounds = array<i64: 1, 1>, scalar_prefetch = 0 : i64, scratch_operands = 1 : i64, tpu.core_type = #tpu.core_type<tc>, window_params = [{transform_indices = @transform_0, window_bounds = array<i64: 8, 16>}, {transform_indices = @transform_1, window_bounds = array<i64: 8, 1>}, {pipeline_mode = #tpu.pipeline_mode<synchronous>, transform_indices = @transform_2, window_bounds = array<i64: 1, 16>}, {transform_indices = @transform_3, window_bounds = array<i64: 1, 1, 1>}]} {
    %c0_i32 = arith.constant 0 : i32
    %0 = arith.cmpi eq, %arg1, %c0_i32 : i32
    %1 = arith.extui %0 : i1 to i32
    %c0_i32_0 = arith.constant 0 : i32
    %2 = arith.cmpi ne, %1, %c0_i32_0 : i32
    scf.if %2 {
      %cst_22 = arith.constant 0.000000e+00 : f32
      %55 = vector.broadcast %cst_22 : f32 to vector<1x1xf32>
      %c0_23 = arith.constant 0 : index
      %c0_24 = arith.constant 0 : index
      %56 = vector.load %arg6[%c0_23, %c0_24] : memref<1x1xf32, #tpu.memory_space<vmem>>, vector<1x1xf32>
      tpu.vector_store %arg6[%c0_23, %c0_24], %55 {strides = array<i32>} : memref<1x1xf32, #tpu.memory_space<vmem>>, vector<1x1xf32>,
    } else {
    }
    %c0 = arith.constant 0 : index
    %c0_1 = arith.constant 0 : index
    %3 = vector.load %arg2[%c0, %c0_1] : memref<8x16xf32, #tpu.memory_space<vmem>>, vector<8x16xf32>
    %c0_2 = arith.constant 0 : index
    %c0_3 = arith.constant 0 : index
    %4 = vector.load %arg3[%c0_2, %c0_3] : memref<8x1xi32, #tpu.memory_space<vmem>>, vector<8x1xi32>
    %c0_4 = arith.constant 0 : index
    %c0_5 = arith.constant 0 : index
    %5 = vector.load %arg4[%c0_4, %c0_5] : memref<1x16xf32, #tpu.memory_space<vmem>>, vector<1x16xf32>
    %cst = arith.constant dense<0xFF800000> : vector<8xf32>
    %6 = vector.multi_reduction <maximumf>, %3, %cst [1] : vector<8x16xf32> to vector<8xf32>
    %7 = vector.shape_cast %6 : vector<8xf32> to vector<8x1xf32>
    %8 = vector.broadcast %7 : vector<8x1xf32> to vector<8x16xf32>
    %9 = arith.subf %3, %8 : vector<8x16xf32>
    %10 = math.exp %9 : vector<8x16xf32>
    %cst_6 = arith.constant dense<0.000000e+00> : vector<8xf32>
    %11 = vector.multi_reduction <add>, %10, %cst_6 [1] : vector<8x16xf32> to vector<8xf32>
    %12 = vector.shape_cast %11 : vector<8xf32> to vector<8x1xf32>
    %13 = tpu.iota {dimensions = array<i32: 1>} : vector<8x16xi32>
    %14 = vector.broadcast %4 : vector<8x1xi32> to vector<8x16xi32>
    %15 = arith.cmpi eq, %13, %14 : vector<8x16xi32>
    %cst_7 = arith.constant 0.000000e+00 : f32
    %16 = vector.broadcast %cst_7 : f32 to vector<8x16xf32>
    %17 = arith.select %15, %3, %16 : vector<8x16xi1>, vector<8x16xf32>
    %cst_8 = arith.constant dense<0.000000e+00> : vector<8xf32>
    %18 = vector.multi_reduction <add>, %17, %cst_8 [1] : vector<8x16xf32> to vector<8xf32>
    %19 = vector.shape_cast %18 : vector<8xf32> to vector<8x1xf32>
    %cst_9 = arith.constant 0.000000e+00 : f32
    %20 = vector.shape_cast %5 : vector<1x16xf32> to vector<1x16xf32>
    %21 = vector.broadcast %20 : vector<1x16xf32> to vector<8x16xf32>
    %22 = vector.broadcast %cst_9 : f32 to vector<8x16xf32>
    %23 = arith.select %15, %21, %22 : vector<8x16xi1>, vector<8x16xf32>
    %cst_10 = arith.constant dense<0.000000e+00> : vector<8xf32>
    %24 = vector.multi_reduction <add>, %23, %cst_10 [1] : vector<8x16xf32> to vector<8xf32>
    %25 = vector.shape_cast %24 : vector<8xf32> to vector<8x1xf32>
    %26 = arith.subf %19, %7 : vector<8x1xf32>
    %27 = math.log %12 : vector<8x1xf32>
    %28 = arith.subf %26, %27 : vector<8x1xf32>
    %29 = math.exp %28 : vector<8x1xf32>
    %cst_11 = arith.constant 1.000000e+00 : f32
    %30 = vector.broadcast %cst_11 : f32 to vector<8x1xf32>
    %31 = arith.subf %30, %29 : vector<8x1xf32>
    %32 = arith.mulf %31, %31 : vector<8x1xf32>
    %cst_12 = arith.constant 0.000000e+00 : f32
    %33 = vector.broadcast %cst_12 : f32 to vector<8x1xf32>
    %34 = arith.subf %33, %25 : vector<8x1xf32>
    %35 = arith.mulf %34, %32 : vector<8x1xf32>
    %36 = arith.mulf %35, %28 : vector<8x1xf32>
    %c1_i32 = arith.constant 1 : i32
    %37 = arith.muli %arg0, %c1_i32 : i32
    %38 = arith.addi %37, %arg1 : i32
    %c8_i32 = arith.constant 8 : i32
    %39 = arith.muli %38, %c8_i32 : i32
    %40 = tpu.iota {dimensions = array<i32: 0>} : vector<8x1xi32>
    %41 = vector.broadcast %39 : i32 to vector<8x1xi32>
    %42 = arith.addi %41, %40 : vector<8x1xi32>
    %c8_i32_13 = arith.constant 8 : i32
    %43 = vector.broadcast %c8_i32_13 : i32 to vector<8x1xi32>
    %44 = arith.cmpi slt, %42, %43 : vector<8x1xi32>
    %cst_14 = arith.constant 0.000000e+00 : f32
    %45 = vector.broadcast %cst_14 : f32 to vector<8x1xf32>
    %46 = arith.select %44, %36, %45 : vector<8x1xi1>, vector<8x1xf32>
    %c0_15 = arith.constant 0 : index
    %c0_16 = arith.constant 0 : index
    %47 = vector.load %arg6[%c0_15, %c0_16] : memref<1x1xf32, #tpu.memory_space<vmem>>, vector<1x1xf32>
    %cst_17 = arith.constant dense<0.000000e+00> : vector<1xf32>
    %48 = vector.multi_reduction <add>, %46, %cst_17 [0] : vector<8x1xf32> to vector<1xf32>
    %49 = vector.shape_cast %48 : vector<1xf32> to vector<1x1xf32>
    %50 = arith.addf %47, %49 : vector<1x1xf32>
    %c0_18 = arith.constant 0 : index
    %c0_19 = arith.constant 0 : index
    %51 = vector.load %arg6[%c0_18, %c0_19] : memref<1x1xf32, #tpu.memory_space<vmem>>, vector<1x1xf32>
    tpu.vector_store %arg6[%c0_18, %c0_19], %50 {strides = array<i32>} : memref<1x1xf32, #tpu.memory_space<vmem>>, vector<1x1xf32>,
    %c0_i32_20 = arith.constant 0 : i32
    %52 = arith.cmpi eq, %arg1, %c0_i32_20 : i32
    %53 = arith.extui %52 : i1 to i32
    %c0_i32_21 = arith.constant 0 : i32
    %54 = arith.cmpi ne, %53, %c0_i32_21 : i32
    scf.if %54 {
      %c0_22 = arith.constant 0 : index
      %c0_23 = arith.constant 0 : index
      %55 = vector.load %arg6[%c0_22, %c0_23] : memref<1x1xf32, #tpu.memory_space<vmem>>, vector<1x1xf32>
      %56 = vector.shape_cast %55 : vector<1x1xf32> to vector<1x1x1xf32>
      %c0_24 = arith.constant 0 : index
      %c0_25 = arith.constant 0 : index
      %c0_26 = arith.constant 0 : index
      %57 = vector.load %arg5[%c0_24, %c0_25, %c0_26] : memref<1x1x1xf32, #tpu.memory_space<vmem>>, vector<1x1x1xf32>
      tpu.vector_store %arg5[%c0_24, %c0_25, %c0_26], %56 {strides = array<i32>} : memref<1x1x1xf32, #tpu.memory_space<vmem>>, vector<1x1x1xf32>,
    } else {
    }
    return
  }
  func.func @transform_0(%arg0: i32, %arg1: i32) -> (i32, i32) {
    %c1_i32 = arith.constant 1 : i32
    %0 = arith.muli %arg0, %c1_i32 : i32
    %1 = arith.addi %0, %arg1 : i32
    %c0_i32 = arith.constant 0 : i32
    %2 = arith.minsi %1, %c0_i32 : i32
    %c0_i32_0 = arith.constant 0 : i32
    %c0_i32_1 = arith.constant 0 : i32
    return %2, %c0_i32_0 : i32, i32
  }
  func.func @transform_1(%arg0: i32, %arg1: i32) -> (i32, i32) {
    %c1_i32 = arith.constant 1 : i32
    %0 = arith.muli %arg0, %c1_i32 : i32
    %1 = arith.addi %0, %arg1 : i32
    %c0_i32 = arith.constant 0 : i32
    %2 = arith.minsi %1, %c0_i32 : i32
    %c0_i32_0 = arith.constant 0 : i32
    %c0_i32_1 = arith.constant 0 : i32
    return %2, %c0_i32_0 : i32, i32
  }
  func.func @transform_2(%arg0: i32, %arg1: i32) -> (i32, i32) {
    %c0_i32 = arith.constant 0 : i32
    %c0_i32_0 = arith.constant 0 : i32
    %c0_i32_1 = arith.constant 0 : i32
    return %c0_i32, %c0_i32_0 : i32, i32
  }
  func.func @transform_3(%arg0: i32, %arg1: i32) -> (i32, i32, i32) {
    %c0_i32 = arith.constant 0 : i32
    %c0_i32_0 = arith.constant 0 : i32
    %c0_i32_1 = arith.constant 0 : i32
    return %arg0, %c0_i32, %c0_i32_0 : i32, i32, i32
  }
}

</mosaic_0001>

<llo_original>
// kernel: tpu_custom_call.1
$region0: #{tpu_custom_call.1}
  #allocation0 [shape = 'u32[]', space=smem, size = 0x4, offset = 0x4, fixed_abs, tag = 'smem constant byte address 0x4 - core index']
  #allocation1 [shape = 'u32[144,128]{1,0:T(1,128)}', space=vmem, size = 0x12000, scoped, tag = 'internal scratch']
  #allocation2 [shape = 'f32[1,1]{1,0:T(1,128)}', space=vmem, size = 0x200, scoped, tag = 'scratch operand']
  %s0 = inlined_call_operand.vmem [shape: f32[8,16], index: 0, kind: input, shape index: {}]
  %s1 = inlined_call_operand.vmem [shape: s32[8,1], index: 1, kind: input, shape index: {}]
  %s2 = inlined_call_operand.vmem [shape: f32[1,16], index: 2, kind: input, shape index: {}]
  %s3 = inlined_call_operand.hbm [shape: f32[1,1,1], index: 3, kind: output, shape index: {}]
  %s4 = sld [smem:[#allocation0]]
  $region30: #{tpu_custom_call.1} parent=0
    _
  %s6 = ssub.s32 1, %s4
  %s7 = scalar_select 0, %s6, %s4
  $region1: #{tpu_custom_call.1} parent=0
    #allocation3 [shape = 'u8[512]{0}', space=vmem, size = 0x400, scoped, tag = 'output window, operand 0, single buffered']
    #allocation4 [shape = 's32[1]{0}', space=sflag, size = 0x4, scoped, tag = 'scoped memory for tpu_custom_call.1']
    %8 = vsyncpa [#allocation4], 0
    // Predicated region
    $region2: #{tpu_custom_call.1} parent=1 // pred_check
      _
    $region3: #{tpu_custom_call.1} parent=1 // pred_check_branch
      %10 = sbr.rel (0) target = $region5
    $region4: #{tpu_custom_call.1} parent=1 // pred_region
      %s11 = sadd.s32 0, 0
      %p12 = scmp.lt.s32.totalorder %s11, 0
      %s13 = scalar_select %p12, %s11, 0
      %p14 = scmp.lt.s32.totalorder %s13, 0
      %s15 = scalar_select %p14, %s13, 0
      %s16 = smul.addr %s15, 8
      %s17 = scalar_lea.vmem %s0, %s16
      %s18 = sadd.s32 0, 0
      %p19 = scmp.lt.s32.totalorder %s18, 0
      %s20 = scalar_select %p19, %s18, 0
    $region5: #{tpu_custom_call.1} parent=1 // pred_fallthru
      _
    // Predicated region
    $region6: #{tpu_custom_call.1} parent=1 // pred_check
      _
    $region7: #{tpu_custom_call.1} parent=1 // pred_check_branch
      %22 = sbr.rel (0) target = $region9
    $region8: #{tpu_custom_call.1} parent=1 // pred_region
      %s23 = sadd.s32 0, 0
      %p24 = scmp.lt.s32.totalorder %s23, 0
      %s25 = scalar_select %p24, %s23, 0
      %p26 = scmp.lt.s32.totalorder %s25, 0
      %s27 = scalar_select %p26, %s25, 0
      %s28 = smul.addr %s27, 8
      %s29 = scalar_lea.vmem %s1, %s28
      %s30 = sadd.s32 0, 0
      %p31 = scmp.lt.s32.totalorder %s30, 0
      %s32 = scalar_select %p31, %s30, 0
    $region9: #{tpu_custom_call.1} parent=1 // pred_fallthru
      _
    // Predicated region
    $region10: #{tpu_custom_call.1} parent=1 // pred_check
      _
    $region11: #{tpu_custom_call.1} parent=1 // pred_check_branch
      %34 = sbr.rel (0) target = $region13
    $region12: #{tpu_custom_call.1} parent=1 // pred_region
      _
    $region13: #{tpu_custom_call.1} parent=1 // pred_fallthru
      _
    %s35 = sadd.s32 0, 0
    %p36 = scmp.lt.s32.totalorder %s35, 0
    %s37 = scalar_select %p36, %s35, 0
    %p38 = scmp.lt.s32.totalorder %s37, 0
    %s39 = scalar_select %p38, %s37, 0
    %s40 = smul.addr %s39, 8
    %s41 = scalar_lea.vmem %s0, %s40
    %s42 = sadd.s32 0, 0
    %p43 = scmp.lt.s32.totalorder %s42, 0
    %s44 = scalar_select %p43, %s42, 0
    %p45 = scmp.lt.s32.totalorder %s44, 0
    %s46 = scalar_select %p45, %s44, 0
    %s47 = smul.addr %s46, 8
    %s48 = scalar_lea.vmem %s1, %s47
    %s49 = sadd.s32 0, 0
    %p50 = scmp.lt.s32.totalorder %s49, 0
    %s51 = scalar_select %p50, %s49, 0
    %p52 = scmp.lt.s32.totalorder %s51, 0
    %s53 = scalar_select %p52, %s51, 0
    %s54 = smul.addr %s53, 8
    %s55 = scalar_lea.vmem %s0, %s54
    %s56 = sadd.s32 0, 0
    %p57 = scmp.lt.s32.totalorder %s56, 0
    %s58 = scalar_select %p57, %s56, 0
    %s59 = sadd.s32 0, 0
    %p60 = scmp.lt.s32.totalorder %s59, 0
    %s61 = scalar_select %p60, %s59, 0
    %p62 = scmp.lt.s32.totalorder %s61, 0
    %s63 = scalar_select %p62, %s61, 0
    %s64 = smul.addr %s63, 8
    %s65 = scalar_lea.vmem %s1, %s64
    %s66 = sadd.s32 0, 0
    %p67 = scmp.lt.s32.totalorder %s66, 0
    %s68 = scalar_select %p67, %s66, 0
    %p69 = scmp.eq.s32.totalorder 0, 0
    // Predicated region
    $region14: #{tpu_custom_call.1} parent=1 // pred_check
      %p70 = pneg %p69
    $region15: #{tpu_custom_call.1} parent=1 // pred_check_branch
      %72 = sbr.rel (%p70) target = $region17
    $region16: #{tpu_custom_call.1} parent=1 // pred_region
      %vm73 = vcmask 0
      %74 = vst.msk [vmem:[#allocation2] sm:$0x1] %vm73, 0.0
    $region17: #{tpu_custom_call.1} parent=1 // pred_fallthru
      _
    %v75 = vld [vmem:[%s55] sm:$0xff]
    %v76 = vld [vmem:[%s65] sm:$0xff]
    %v77 = vld [vmem:[%s2] sm:$0x1]
    %vm78 = vcmask 130048
    %v79 = vsel %vm78, %v75, -inf
    %80 = vmax.xlane.f32.xlu0 %v79
    %v81 = vpop.xlane.xlu0 %80
    %v82 = vsub.f32 %v75, %v81
    %v83 = vmul.f32 %v82, 1.442695
    %v84 = vpow.pop %v83
    %v85 = vsel %vm78, %v84, 0.0
    %86 = vadd.xlane.f32.xlu0 %v85
    %v87 = vpop.xlane.xlu0 %86
    %v88 = vlaneseq
    %v89 = vand.u32 %v88, 127
    %90 = vset.pattern.permute.xlu0 0
    %91 = vperm.xlu0 %90, %v76
    %v92 = vpop.permute.xlu0 %91
    %vm93 = vcmp.eq.s32.totalorder %v89, %v92
    %v94 = vsel %vm93, %v75, 0.0
    %v95 = vsel %vm78, %v94, 0.0
    %96 = vadd.xlane.f32.xlu0 %v95
    %v97 = vpop.xlane.xlu0 %96
    %v99 = vlaneseq
    %v100 = vshrl.u32 %v99, 7
    %v101 = vsub.s32 0, %v100
    %v102 = vrot.slane %v77, %v101
    %v104 = vsel %vm93, %v102, 0.0
    %v105 = vsel %vm78, %v104, 0.0
    %106 = vadd.xlane.f32.xlu0 %v105
    %v107 = vpop.xlane.xlu0 %106
    %v108 = vsub.f32 %v97, %v81
    %v109 = vlog2.pop %v87
    %v110 = vmul.f32 %v109, 0.6931472
    %v111 = vsub.f32 %v108, %v110
    %v112 = vmul.f32 %v111, 1.442695
    %v113 = vpow.pop %v112
    %v114 = vsub.f32 1.0, %v113
    %v115 = vmul.f32 %v114, %v114
    %v116 = vsub.f32 0.0, %v107
    %v117 = vmul.f32 %v116, %v115
    %v118 = vmul.f32 %v117, %v111
    %s119 = sadd.s32 0, 0
    %s120 = smul.u32 %s119, 8
    %v121 = vlaneseq
    %v122 = vshrl.u32 %v121, 7
    %v123 = vstv %s120
    %v124 = vadd.s32 %v123, %v122
    %vm125 = vcmp.lt.s32.totalorder %v124, 8
    %v126 = vsel %vm125, %v118, 0.0
    %v127 = vld [vmem:[#allocation2] sm:$0x1]
    %v128 = vrot.slane %v126, 4
    %v129 = vadd.f32 %v126, %v128
    %v130 = vrot.slane %v129, 2
    %v131 = vadd.f32 %v129, %v130
    %v132 = vrot.slane %v131, 1
    %v133 = vadd.f32 %v131, %v132
    %v134 = vadd.f32 %v127, %v133
    %vm135 = vcmask 0
    %136 = vst.msk [vmem:[#allocation2] sm:$0x1] %vm135, %v134
    // Predicated region
    $region18: #{tpu_custom_call.1} parent=1 // pred_check
      %p137 = pneg %p69
    $region19: #{tpu_custom_call.1} parent=1 // pred_check_branch
      %139 = sbr.rel (%p137) target = $region21
    $region20: #{tpu_custom_call.1} parent=1 // pred_region
      %v140 = vld [vmem:[#allocation2] sm:$0x1]
      %141 = vst.msk [vmem:[#allocation3] sm:$0x1] %vm135, %v140
    $region21: #{tpu_custom_call.1} parent=1 // pred_fallthru
      _
    // Predicated region
    $region22: #{tpu_custom_call.1} parent=1 // pred_check
      _
    $region23: #{tpu_custom_call.1} parent=1 // pred_check_branch
      %143 = sbr.rel (0) target = $region25
    $region24: #{tpu_custom_call.1} parent=1 // pred_region
      %s145 = ssub.s32 16, 16
      %146 = vsyncadd [#allocation4], %s145
      %s148 = sshll.u32 [#allocation3], 4
      %s149 = int_to_ptr.vmem [resolvable:$true] %s148
      %151 = dma.vmem_to_hbm [thread:$0]  %s149, 16, %s3, [#allocation4]
    $region25: #{tpu_custom_call.1} parent=1 // pred_fallthru
      _
    // Predicated region
    $region26: #{tpu_custom_call.1} parent=1 // pred_check
      _
    $region27: #{tpu_custom_call.1} parent=1 // pred_check_branch
      %153 = sbr.rel (0) target = $region29
    $region28: #{tpu_custom_call.1} parent=1 // pred_region
      %154 = dma.done [#allocation4], 16
    $region29: #{tpu_custom_call.1} parent=1 // pred_fallthru
      _
    %155 = vsyncpa [#allocation4], 1

</llo_original>
